<compile_context>
chip_gen: v6e
topology: v6e:2x2x1
jax: 0.10.0
libtpu: 0.0.40
codegen_flags: <defaults>
</compile_context>

<pallas_src>
from functools import partial

import jax
import jax.numpy as jnp
from jax.experimental import pallas as pl
from jax.experimental.pallas import tpu as pltpu

_LANES = 128
_ACC_ROWS = 8  # sublane depth of one f32 vreg / the accumulator block


def _bundl_kernel(d_ref, plab_ref, pprior_ref, punc_ref, acc_ref,
                  *, eps: float, over: int, tiles_per_core: int,
                  tile_rows: int, n_valid: int, need_mask: bool):
    c = pl.program_id(0)   # core-split axis ("parallel")
    i = pl.program_id(1)   # row-tile axis ("arbitrary", accumulated)

    @pl.when(i == 0)
    def _():
        acc_ref[...] = jnp.zeros_like(acc_ref)

    d = d_ref[...].astype(jnp.float32)            # (tile_rows, 128), d = y1 - y0

    # p_label *= 0.999 ; p_label[p_label == 0] = 0.001
    p_scaled = plab_ref[...].astype(jnp.float32) * jnp.float32(0.999)
    p_label = jnp.where(p_scaled == 0.0, jnp.float32(0.001), p_scaled)

    p_prior = pprior_ref[...].astype(jnp.float32)
    p_unc = punc_ref[...].astype(jnp.float32)

    term1 = p_unc * p_prior + (1.0 - p_unc) * p_label
    if over == 1:
        term2 = eps * p_prior + (1.0 - eps) * p_label
        p_1 = p_label * term1 + (1.0 - p_label) * term2
    elif over == -1:
        term2 = eps * p_prior + (1.0 - eps) * p_label
        p_1 = p_label * term2 + (1.0 - p_label) * term1
    else:
        p_1 = term1

    # -p1*log p_theta1 - (1-p1)*log p_theta0 == softplus(y1-y0) - p1*(y1-y0)
    softplus = jnp.maximum(d, 0.0) + jnp.log(1.0 + jnp.exp(-jnp.abs(d)))
    loss = softplus - p_1 * d

    if need_mask:
        base = (c * tiles_per_core + i) * (tile_rows * _LANES)
        rid = jax.lax.broadcasted_iota(jnp.int32, (tile_rows, _LANES), 0)
        lid = jax.lax.broadcasted_iota(jnp.int32, (tile_rows, _LANES), 1)
        gidx = base + rid * _LANES + lid
        loss = jnp.where(gidx < n_valid, loss, 0.0)

    # fold down to one (8, 128) vreg tile with VALU adds only (no XLU reduce)
    if tile_rows == _ACC_ROWS:
        partial_sum = loss
    else:
        partial_sum = loss.reshape(tile_rows // _ACC_ROWS, _ACC_ROWS,
                                   _LANES).sum(axis=0)

    acc_ref[...] += partial_sum


def bundl_loss(ypred, p_label, p_prior, p_unc, *, eps=0.001, over=1,
               max_tile_rows=1024):
    """Pallas implementation of BUNDL.forward (returns the scalar mean loss)."""
    n = int(ypred.shape[0])
    assert ypred.shape[-1] == 2, "BUNDL expects 2-class logits"

    rows = -(-n // _LANES)
    rows_p = -(-rows // _ACC_ROWS) * _ACC_ROWS      # rows padded to multiple of 8
    n_pad = rows_p * _LANES
    pad = n_pad - n

    # largest multiple-of-8 divisor of rows_p that is <= max_tile_rows
    tr = min(int(max_tile_rows), rows_p)
    tr = max(tr - tr % _ACC_ROWS, _ACC_ROWS)
    while rows_p % tr != 0:
        tr -= _ACC_ROWS
    tiles = rows_p // tr
    ncores = 2 if tiles % 2 == 0 else 1   # v7x: 2 TensorCores; harmless elsewhere
    tpc = tiles // ncores

    # The kernel only needs d = y1 - y0 (softplus form) -> one logit stream.
    d = ypred[:, 1].astype(jnp.float32) - ypred[:, 0].astype(jnp.float32)
    if pad:
        d = jnp.pad(d, (0, pad))
        p_label = jnp.pad(p_label, (0, pad))
        p_prior = jnp.pad(p_prior, (0, pad))
        p_unc = jnp.pad(p_unc, (0, pad))

    d = d.reshape(rows_p, _LANES)
    pl_ = p_label.reshape(rows_p, _LANES)
    pp = p_prior.reshape(rows_p, _LANES)
    pu = p_unc.reshape(rows_p, _LANES)

    kernel = partial(_bundl_kernel, eps=float(eps), over=int(over),
                     tiles_per_core=tpc, tile_rows=tr, n_valid=n,
                     need_mask=(pad > 0))

    row_spec = pl.BlockSpec((tr, _LANES), lambda c, i: (c * tpc + i, 0))
    partials = pl.pallas_call(
        kernel,
        out_shape=jax.ShapeDtypeStruct((ncores * _ACC_ROWS, _LANES),
                                       jnp.float32),
        grid=(ncores, tpc),
        in_specs=[row_spec, row_spec, row_spec, row_spec],
        out_specs=pl.BlockSpec((_ACC_ROWS, _LANES), lambda c, i: (c, 0)),
        compiler_params=pltpu.CompilerParams(
            dimension_semantics=("parallel", "arbitrary")),
    )(d, pl_, pp, pu)

    return jnp.sum(partials) / jnp.float32(n)


def _reference(ypred, p_label, p_prior, p_unc, eps=0.001, over=1):
    """Pure-JAX reference mirroring the PyTorch forward."""
    p_theta = jax.nn.softmax(ypred, axis=-1)
    p_label = p_label * 0.999
    p_label = jnp.where(p_label == 0.0, 0.001, p_label)
    term1 = p_unc * p_prior + (1 - p_unc) * p_label
    term2 = eps * p_prior + (1 - eps) * p_label
    if over == 1:
        p_1 = p_label * term1 + (1 - p_label) * term2
    elif over == -1:
        p_1 = p_label * term2 + (1 - p_label) * term1
    else:
        p_1 = term1
    fit = -p_1 * jnp.log(p_theta[:, 1]) - (1 - p_1) * jnp.log(p_theta[:, 0])
    return fit.mean()


def _make_inputs(key, n):
    k1, k2, k3, k4 = jax.random.split(key, 4)
    ypred = jax.random.normal(k1, (n, 2), dtype=jnp.float32)
    # binary labels (contains exact zeros -> exercises the p_label==0 branch)
    p_label = jax.random.bernoulli(k2, 0.5, (n,)).astype(jnp.float32)
    p_prior = jax.random.uniform(k3, (n,), dtype=jnp.float32)
    p_unc = jax.random.uniform(k4, (n,), dtype=jnp.float32)
    return ypred, p_label, p_prior, p_unc


if __name__ == "__main__":
    key = jax.random.PRNGKey(0)
    ka, kb, kc, kd = jax.random.split(key, 4)

    # 1) small, lane-aligned, single tile (padded + masked)
    args = _make_inputs(ka, 256)
    out = jax.block_until_ready(bundl_loss(*args, eps=0.001, over=1))
    ref = _reference(*args, eps=0.001, over=1)
    assert jnp.allclose(out, ref, rtol=2e-5, atol=1e-6), (out, ref)

    # 2) ragged N (not a multiple of 128) -> exercises the in-kernel mask
    args = _make_inputs(kb, 1000)
    out = jax.block_until_ready(bundl_loss(*args, eps=0.001, over=1))
    ref = _reference(*args, eps=0.001, over=1)
    assert jnp.allclose(out, ref, rtol=2e-5, atol=1e-6), (out, ref)

    # 3) multi-tile, 2-way "parallel" grid split, accumulation, over=-1 branch
    args = _make_inputs(kc, 8192)
    out = jax.block_until_ready(
        bundl_loss(*args, eps=0.001, over=-1, max_tile_rows=16))
    ref = _reference(*args, eps=0.001, over=-1)
    assert jnp.allclose(out, ref, rtol=2e-5, atol=1e-6), (out, ref)

    # 4) over = 0 branch (p_1 = term1)
    args = _make_inputs(kd, 512)
    out = jax.block_until_ready(bundl_loss(*args, eps=0.001, over=0))
    ref = _reference(*args, eps=0.001, over=0)
    assert jnp.allclose(out, ref, rtol=2e-5, atol=1e-6), (out, ref)

    print("KERNEL_OK")
</pallas_src>

<mosaic_0001>
module attributes {stable_mosaic.version = 11 : i64} {
  func.func @_bundl_kernel(%arg0: i32, %arg1: i32, %arg2: memref<8x128xf32, #tpu.memory_space<vmem>>, %arg3: memref<8x128xf32, #tpu.memory_space<vmem>>, %arg4: memref<8x128xf32, #tpu.memory_space<vmem>>, %arg5: memref<8x128xf32, #tpu.memory_space<vmem>>, %arg6: memref<8x128xf32, #tpu.memory_space<vmem>>) attributes {dimension_semantics = [#tpu.dimension_semantics<parallel>, #tpu.dimension_semantics<arbitrary>], iteration_bounds = array<i64: 1, 1>, scalar_prefetch = 0 : i64, scratch_operands = 0 : i64, tpu.core_type = #tpu.core_type<tc>, window_params = [{transform_indices = @transform_0, window_bounds = array<i64: 8, 128>}, {transform_indices = @transform_1, window_bounds = array<i64: 8, 128>}, {transform_indices = @transform_2, window_bounds = array<i64: 8, 128>}, {transform_indices = @transform_3, window_bounds = array<i64: 8, 128>}, {transform_indices = @transform_4, window_bounds = array<i64: 8, 128>}]} {
    %c0_i32 = arith.constant 0 : i32
    %0 = arith.cmpi eq, %arg1, %c0_i32 : i32
    %1 = arith.extui %0 : i1 to i32
    %c0_i32_0 = arith.constant 0 : i32
    %2 = arith.cmpi ne, %1, %c0_i32_0 : i32
    scf.if %2 {
      %cst_22 = arith.constant 0.000000e+00 : f32
      %57 = vector.broadcast %cst_22 : f32 to vector<8x128xf32>
      %c0_23 = arith.constant 0 : index
      %c0_24 = arith.constant 0 : index
      %58 = vector.load %arg6[%c0_23, %c0_24] : memref<8x128xf32, #tpu.memory_space<vmem>>, vector<8x128xf32>
      tpu.vector_store %arg6[%c0_23, %c0_24], %57 {strides = array<i32>} : memref<8x128xf32, #tpu.memory_space<vmem>>, vector<8x128xf32>,
    } else {
    }
    %c0 = arith.constant 0 : index
    %c0_1 = arith.constant 0 : index
    %3 = vector.load %arg2[%c0, %c0_1] : memref<8x128xf32, #tpu.memory_space<vmem>>, vector<8x128xf32>
    %c0_2 = arith.constant 0 : index
    %c0_3 = arith.constant 0 : index
    %4 = vector.load %arg3[%c0_2, %c0_3] : memref<8x128xf32, #tpu.memory_space<vmem>>, vector<8x128xf32>
    %cst = arith.constant 9.990000e-01 : f32
    %5 = vector.broadcast %cst : f32 to vector<8x128xf32>
    %6 = arith.mulf %4, %5 : vector<8x128xf32>
    %cst_4 = arith.constant 0.000000e+00 : f32
    %7 = vector.broadcast %cst_4 : f32 to vector<8x128xf32>
    %8 = arith.cmpf oeq, %6, %7 : vector<8x128xf32>
    %cst_5 = arith.constant 1.000000e-03 : f32
    %9 = vector.broadcast %cst_5 : f32 to vector<8x128xf32>
    %10 = arith.select %8, %9, %6 : vector<8x128xi1>, vector<8x128xf32>
    %c0_6 = arith.constant 0 : index
    %c0_7 = arith.constant 0 : index
    %11 = vector.load %arg4[%c0_6, %c0_7] : memref<8x128xf32, #tpu.memory_space<vmem>>, vector<8x128xf32>
    %c0_8 = arith.constant 0 : index
    %c0_9 = arith.constant 0 : index
    %12 = vector.load %arg5[%c0_8, %c0_9] : memref<8x128xf32, #tpu.memory_space<vmem>>, vector<8x128xf32>
    %13 = arith.mulf %12, %11 : vector<8x128xf32>
    %cst_10 = arith.constant 1.000000e+00 : f32
    %14 = vector.broadcast %cst_10 : f32 to vector<8x128xf32>
    %15 = arith.subf %14, %12 : vector<8x128xf32>
    %16 = arith.mulf %15, %10 : vector<8x128xf32>
    %17 = arith.addf %13, %16 : vector<8x128xf32>
    %cst_11 = arith.constant 1.000000e-03 : f32
    %18 = vector.broadcast %cst_11 : f32 to vector<8x128xf32>
    %19 = arith.mulf %18, %11 : vector<8x128xf32>
    %cst_12 = arith.constant 9.990000e-01 : f32
    %20 = vector.broadcast %cst_12 : f32 to vector<8x128xf32>
    %21 = arith.mulf %20, %10 : vector<8x128xf32>
    %22 = arith.addf %19, %21 : vector<8x128xf32>
    %23 = arith.mulf %10, %17 : vector<8x128xf32>
    %cst_13 = arith.constant 1.000000e+00 : f32
    %24 = vector.broadcast %cst_13 : f32 to vector<8x128xf32>
    %25 = arith.subf %24, %10 : vector<8x128xf32>
    %26 = arith.mulf %25, %22 : vector<8x128xf32>
    %27 = arith.addf %23, %26 : vector<8x128xf32>
    %cst_14 = arith.constant 0.000000e+00 : f32
    %28 = vector.broadcast %cst_14 : f32 to vector<8x128xf32>
    %29 = arith.maximumf %3, %28 : vector<8x128xf32>
    %30 = math.absf %3 : vector<8x128xf32>
    %cst_15 = arith.constant 0.000000e+00 : f32
    %31 = vector.broadcast %cst_15 : f32 to vector<8x128xf32>
    %32 = arith.subf %31, %30 : vector<8x128xf32>
    %33 = math.exp %32 : vector<8x128xf32>
    %cst_16 = arith.constant 1.000000e+00 : f32
    %34 = vector.broadcast %cst_16 : f32 to vector<8x128xf32>
    %35 = arith.addf %34, %33 : vector<8x128xf32>
    %36 = math.log %35 : vector<8x128xf32>
    %37 = arith.addf %29, %36 : vector<8x128xf32>
    %38 = arith.mulf %27, %3 : vector<8x128xf32>
    %39 = arith.subf %37, %38 : vector<8x128xf32>
    %c1_i32 = arith.constant 1 : i32
    %40 = arith.muli %arg0, %c1_i32 : i32
    %41 = arith.addi %40, %arg1 : i32
    %c1024_i32 = arith.constant 1024 : i32
    %42 = arith.muli %41, %c1024_i32 : i32
    %43 = tpu.iota {dimensions = array<i32: 0>} : vector<8x128xi32>
    %44 = tpu.iota {dimensions = array<i32: 1>} : vector<8x128xi32>
    %c128_i32 = arith.constant 128 : i32
    %45 = vector.broadcast %c128_i32 : i32 to vector<8x128xi32>
    %46 = arith.muli %43, %45 : vector<8x128xi32>
    %47 = vector.broadcast %42 : i32 to vector<8x128xi32>
    %48 = arith.addi %47, %46 : vector<8x128xi32>
    %49 = arith.addi %48, %44 : vector<8x128xi32>
    %c256_i32 = arith.constant 256 : i32
    %50 = vector.broadcast %c256_i32 : i32 to vector<8x128xi32>
    %51 = arith.cmpi slt, %49, %50 : vector<8x128xi32>
    %cst_17 = arith.constant 0.000000e+00 : f32
    %52 = vector.broadcast %cst_17 : f32 to vector<8x128xf32>
    %53 = arith.select %51, %39, %52 : vector<8x128xi1>, vector<8x128xf32>
    %c0_18 = arith.constant 0 : index
    %c0_19 = arith.constant 0 : index
    %54 = vector.load %arg6[%c0_18, %c0_19] : memref<8x128xf32, #tpu.memory_space<vmem>>, vector<8x128xf32>
    %55 = arith.addf %54, %53 : vector<8x128xf32>
    %c0_20 = arith.constant 0 : index
    %c0_21 = arith.constant 0 : index
    %56 = vector.load %arg6[%c0_20, %c0_21] : memref<8x128xf32, #tpu.memory_space<vmem>>, vector<8x128xf32>
    tpu.vector_store %arg6[%c0_20, %c0_21], %55 {strides = array<i32>} : memref<8x128xf32, #tpu.memory_space<vmem>>, vector<8x128xf32>,
    return
  }
  func.func @transform_0(%arg0: i32, %arg1: i32) -> (i32, i32) {
    %c1_i32 = arith.constant 1 : i32
    %0 = arith.muli %arg0, %c1_i32 : i32
    %1 = arith.addi %0, %arg1 : i32
    %c0_i32 = arith.constant 0 : i32
    %c0_i32_0 = arith.constant 0 : i32
    return %1, %c0_i32 : i32, i32
  }
  func.func @transform_1(%arg0: i32, %arg1: i32) -> (i32, i32) {
    %c1_i32 = arith.constant 1 : i32
    %0 = arith.muli %arg0, %c1_i32 : i32
    %1 = arith.addi %0, %arg1 : i32
    %c0_i32 = arith.constant 0 : i32
    %c0_i32_0 = arith.constant 0 : i32
    return %1, %c0_i32 : i32, i32
  }
  func.func @transform_2(%arg0: i32, %arg1: i32) -> (i32, i32) {
    %c1_i32 = arith.constant 1 : i32
    %0 = arith.muli %arg0, %c1_i32 : i32
    %1 = arith.addi %0, %arg1 : i32
    %c0_i32 = arith.constant 0 : i32
    %c0_i32_0 = arith.constant 0 : i32
    return %1, %c0_i32 : i32, i32
  }
  func.func @transform_3(%arg0: i32, %arg1: i32) -> (i32, i32) {
    %c1_i32 = arith.constant 1 : i32
    %0 = arith.muli %arg0, %c1_i32 : i32
    %1 = arith.addi %0, %arg1 : i32
    %c0_i32 = arith.constant 0 : i32
    %c0_i32_0 = arith.constant 0 : i32
    return %1, %c0_i32 : i32, i32
  }
  func.func @transform_4(%arg0: i32, %arg1: i32) -> (i32, i32) {
    %c0_i32 = arith.constant 0 : i32
    %c0_i32_0 = arith.constant 0 : i32
    return %arg0, %c0_i32 : i32, i32
  }
}

</mosaic_0001>

<llo_original>
// kernel: tpu_custom_call.1
$region0: #{tpu_custom_call.1}
  #allocation0 [shape = 'u32[]', space=smem, size = 0x4, offset = 0x4, fixed_abs, tag = 'smem constant byte address 0x4 - core index']
  #allocation1 [shape = 'u32[144,128]{1,0:T(1,128)}', space=vmem, size = 0x12000, scoped, tag = 'internal scratch']
  %s0 = inlined_call_operand.hbm [shape: f32[8,128], index: 0, kind: input, shape index: {}]
  %s1 = inlined_call_operand.hbm [shape: f32[8,128], index: 1, kind: input, shape index: {}]
  %s2 = inlined_call_operand.hbm [shape: f32[8,128], index: 2, kind: input, shape index: {}]
  %s3 = inlined_call_operand.hbm [shape: f32[8,128], index: 3, kind: input, shape index: {}]
  %s4 = inlined_call_operand.hbm [shape: f32[8,128], index: 4, kind: output, shape index: {}]
  %s5 = sld [smem:[#allocation0]]
  $region46: #{tpu_custom_call.1} parent=0
    _
  %s7 = ssub.s32 1, %s5
  %s8 = scalar_select 0, %s7, %s5
  $region1: #{tpu_custom_call.1} parent=0
    #allocation2 [shape = 'u8[4096]{0}', space=vmem, size = 0x1000, scoped, tag = 'input window, operand 0, single buffered']
    #allocation3 [shape = 's32[1]{0}', space=sflag, size = 0x4, scoped, tag = 'scoped memory for tpu_custom_call.1']
    #allocation4 [shape = 's32[1]{0}', space=sflag, size = 0x4, scoped, tag = 'scoped memory for tpu_custom_call.1']
    #allocation5 [shape = 'u8[4096]{0}', space=vmem, size = 0x1000, scoped, tag = 'input window, operand 1, single buffered']
    #allocation6 [shape = 's32[1]{0}', space=sflag, size = 0x4, scoped, tag = 'scoped memory for tpu_custom_call.1']
    #allocation7 [shape = 'u8[4096]{0}', space=vmem, size = 0x1000, scoped, tag = 'input window, operand 2, single buffered']
    #allocation8 [shape = 'u8[4096]{0}', space=vmem, size = 0x1000, scoped, tag = 'input window, operand 3, single buffered']
    #allocation9 [shape = 's32[1]{0}', space=sflag, size = 0x4, scoped, tag = 'scoped memory for tpu_custom_call.1']
    #allocation10 [shape = 'u8[4096]{0}', space=vmem, size = 0x1000, scoped, tag = 'output window, operand 0, single buffered']
    %9 = vsyncpa [#allocation3], 0
    %10 = vsyncpa [#allocation6], 0
    %11 = vsyncpa [#allocation9], 0
    %12 = vsyncpa [#allocation4], 0
    // Predicated region
    $region2: #{tpu_custom_call.1} parent=1 // pred_check
      _
    $region3: #{tpu_custom_call.1} parent=1 // pred_check_branch
      %14 = sbr.rel (0) target = $region5
    $region4: #{tpu_custom_call.1} parent=1 // pred_region
      %s15 = sadd.s32 0, 0
      %s17 = ssub.s32 128, 128
      %18 = vsyncadd [#allocation3], %s17
      %s19 = smul.addr %s15, 128
      %s20 = scalar_lea.hbm %s0, %s19
      %s22 = sshll.u32 [#allocation2], 4
      %s23 = int_to_ptr.vmem [resolvable:$true] %s22
      %25 = dma.hbm_to_vmem [thread:$0]  %s20, 128, %s23, [#allocation3]
    $region5: #{tpu_custom_call.1} parent=1 // pred_fallthru
      _
    // Predicated region
    $region6: #{tpu_custom_call.1} parent=1 // pred_check
      _
    $region7: #{tpu_custom_call.1} parent=1 // pred_check_branch
      %27 = sbr.rel (0) target = $region9
    $region8: #{tpu_custom_call.1} parent=1 // pred_region
      %s28 = sadd.s32 0, 0
      %s30 = ssub.s32 128, 128
      %31 = vsyncadd [#allocation6], %s30
      %s32 = smul.addr %s28, 128
      %s33 = scalar_lea.hbm %s1, %s32
      %s35 = sshll.u32 [#allocation5], 4
      %s36 = int_to_ptr.vmem [resolvable:$true] %s35
      %38 = dma.hbm_to_vmem [thread:$0]  %s33, 128, %s36, [#allocation6]
    $region9: #{tpu_custom_call.1} parent=1 // pred_fallthru
      _
    // Predicated region
    $region10: #{tpu_custom_call.1} parent=1 // pred_check
      _
    $region11: #{tpu_custom_call.1} parent=1 // pred_check_branch
      %40 = sbr.rel (0) target = $region13
    $region12: #{tpu_custom_call.1} parent=1 // pred_region
      %s41 = sadd.s32 0, 0
      %s43 = ssub.s32 128, 128
      %44 = vsyncadd [#allocation6], %s43
      %s45 = smul.addr %s41, 128
      %s46 = scalar_lea.hbm %s2, %s45
      %s48 = sshll.u32 [#allocation7], 4
      %s49 = int_to_ptr.vmem [resolvable:$true] %s48
      %51 = dma.hbm_to_vmem [thread:$0]  %s46, 128, %s49, [#allocation6]
    $region13: #{tpu_custom_call.1} parent=1 // pred_fallthru
      _
    // Predicated region
    $region14: #{tpu_custom_call.1} parent=1 // pred_check
      _
    $region15: #{tpu_custom_call.1} parent=1 // pred_check_branch
      %53 = sbr.rel (0) target = $region17
    $region16: #{tpu_custom_call.1} parent=1 // pred_region
      %s54 = sadd.s32 0, 0
      %s56 = ssub.s32 128, 128
      %57 = vsyncadd [#allocation9], %s56
      %s58 = smul.addr %s54, 128
      %s59 = scalar_lea.hbm %s3, %s58
      %s61 = sshll.u32 [#allocation8], 4
      %s62 = int_to_ptr.vmem [resolvable:$true] %s61
      %64 = dma.hbm_to_vmem [thread:$0]  %s59, 128, %s62, [#allocation9]
    $region17: #{tpu_custom_call.1} parent=1 // pred_fallthru
      _
    // Predicated region
    $region18: #{tpu_custom_call.1} parent=1 // pred_check
      _
    $region19: #{tpu_custom_call.1} parent=1 // pred_check_branch
      %66 = sbr.rel (0) target = $region21
    $region20: #{tpu_custom_call.1} parent=1 // pred_region
      %67 = dma.done [#allocation3], 128
    $region21: #{tpu_custom_call.1} parent=1 // pred_fallthru
      _
    // Predicated region
    $region22: #{tpu_custom_call.1} parent=1 // pred_check
      _
    $region23: #{tpu_custom_call.1} parent=1 // pred_check_branch
      %69 = sbr.rel (0) target = $region25
    $region24: #{tpu_custom_call.1} parent=1 // pred_region
      %70 = dma.done [#allocation6], 128
    $region25: #{tpu_custom_call.1} parent=1 // pred_fallthru
      _
    // Predicated region
    $region26: #{tpu_custom_call.1} parent=1 // pred_check
      _
    $region27: #{tpu_custom_call.1} parent=1 // pred_check_branch
      %72 = sbr.rel (0) target = $region29
    $region28: #{tpu_custom_call.1} parent=1 // pred_region
      %73 = dma.done [#allocation6], 128
    $region29: #{tpu_custom_call.1} parent=1 // pred_fallthru
      _
    // Predicated region
    $region30: #{tpu_custom_call.1} parent=1 // pred_check
      _
    $region31: #{tpu_custom_call.1} parent=1 // pred_check_branch
      %75 = sbr.rel (0) target = $region33
    $region32: #{tpu_custom_call.1} parent=1 // pred_region
      %76 = dma.done [#allocation9], 128
    $region33: #{tpu_custom_call.1} parent=1 // pred_fallthru
      _
    %s77 = sadd.s32 0, 0
    %s78 = sadd.s32 0, 0
    %s79 = sadd.s32 0, 0
    %s80 = sadd.s32 0, 0
    %p81 = scmp.eq.s32.totalorder 0, 0
    // Predicated region
    $region34: #{tpu_custom_call.1} parent=1 // pred_check
      %p82 = pneg %p81
    $region35: #{tpu_custom_call.1} parent=1 // pred_check_branch
      %84 = sbr.rel (%p82) target = $region37
    $region36: #{tpu_custom_call.1} parent=1 // pred_region
      %85 = vst [vmem:[#allocation10] sm:$0xff] 0.0
    $region37: #{tpu_custom_call.1} parent=1 // pred_fallthru
      _
    %v86 = vld [vmem:[#allocation2] sm:$0xff]
    %v87 = vld [vmem:[#allocation5] sm:$0xff]
    %v88 = vmul.f32 %v87, 0.999
    %vm89 = vcmp.eq.f32.partialorder %v88, 0.0
    %v90 = vsel %vm89, 0.001, %v88
    %v91 = vld [vmem:[#allocation7] sm:$0xff]
    %v92 = vld [vmem:[#allocation8] sm:$0xff]
    %v93 = vmul.f32 %v92, %v91
    %v94 = vsub.f32 1.0, %v92
    %v95 = vmul.f32 %v94, %v90
    %v96 = vadd.f32 %v93, %v95
    %v97 = vmul.f32 %v91, 0.001
    %v98 = vmul.f32 %v90, 0.999
    %v99 = vadd.f32 %v97, %v98
    %v100 = vmul.f32 %v90, %v96
    %v101 = vsub.f32 1.0, %v90
    %v102 = vmul.f32 %v101, %v99
    %v103 = vadd.f32 %v100, %v102
    %v104 = vmax.f32 %v86, 0.0
    %v105 = vand.u32 2147483647, %v86
    %v106 = vsub.f32 0.0, %v105
    %v107 = vmul.f32 %v106, 1.442695
    %v108 = vpow.pop %v107
    %v109 = vadd.f32 %v108, 1.0
    %v110 = vlog2.pop %v109
    %v111 = vmul.f32 %v110, 0.6931472
    %v112 = vadd.f32 %v104, %v111
    %v113 = vmul.f32 %v103, %v86
    %v114 = vsub.f32 %v112, %v113
    %s115 = sadd.s32 0, 0
    %s116 = smul.u32 %s115, 1024
    %v117 = vlaneseq
    %v118 = vshrl.u32 %v117, 7
    %v119 = vlaneseq
    %v120 = vand.u32 %v119, 127
    %v121 = vmul.u32 %v118, 128
    %v122 = vstv %s116
    %v123 = vadd.s32 %v122, %v121
    %v124 = vadd.s32 %v123, %v120
    %vm125 = vcmp.lt.s32.totalorder %v124, 256
    %v126 = vsel %vm125, %v114, 0.0
    %v127 = vld [vmem:[#allocation10] sm:$0xff]
    %v128 = vadd.f32 %v127, %v126
    %129 = vst [vmem:[#allocation10] sm:$0xff] %v128
    // Predicated region
    $region38: #{tpu_custom_call.1} parent=1 // pred_check
      _
    $region39: #{tpu_custom_call.1} parent=1 // pred_check_branch
      %131 = sbr.rel (0) target = $region41
    $region40: #{tpu_custom_call.1} parent=1 // pred_region
      %s133 = ssub.s32 128, 128
      %134 = vsyncadd [#allocation4], %s133
      %s136 = sshll.u32 [#allocation10], 4
      %s137 = int_to_ptr.vmem [resolvable:$true] %s136
      %139 = dma.vmem_to_hbm [thread:$0]  %s137, 128, %s4, [#allocation4]
    $region41: #{tpu_custom_call.1} parent=1 // pred_fallthru
      _
    // Predicated region
    $region42: #{tpu_custom_call.1} parent=1 // pred_check
      _
    $region43: #{tpu_custom_call.1} parent=1 // pred_check_branch
      %141 = sbr.rel (0) target = $region45
    $region44: #{tpu_custom_call.1} parent=1 // pred_region
      %142 = dma.done [#allocation4], 128
    $region45: #{tpu_custom_call.1} parent=1 // pred_fallthru
      _
    %143 = vsyncpa [#allocation3], 1
    %144 = vsyncpa [#allocation6], 1
    %145 = vsyncpa [#allocation9], 1
    %146 = vsyncpa [#allocation4], 1

</llo_original>
